<compile_context>
chip_gen: v6e
topology: v6e:2x2x1
jax: 0.10.0
libtpu: 0.0.40
codegen_flags: <defaults>
</compile_context>

<pallas_src>
import functools
import math

import jax
import jax.numpy as jnp
from jax import lax
from jax.experimental import pallas as pl
from jax.experimental.pallas import tpu as pltpu


def _cpf_kernel(labels_ref, x_ref, w_hbm_ref, out_ref,
                wbuf_ref, acc_ref, w_sem,
                *, sp, sn, tau, psi, b, exp_sp, exp_msn, mxu_dtype):
    i = pl.program_id(0)

    @pl.when(i == 0)
    def _init():
        acc_ref[0] = jnp.float32(0.0)   # sum(clamp(cos, 0) * one_hot * 2)
        acc_ref[1] = jnp.float32(0.0)   # lossp
        acc_ref[2] = jnp.float32(0.0)   # lossn
        # Single manual DMA: HBM weight -> VMEM scratch (the only VMEM copy),
        # then L2-normalize in place.  Loop-invariant across all batch tiles.
        cp = pltpu.make_async_copy(w_hbm_ref, wbuf_ref, w_sem)
        cp.start()
        cp.wait()
        w = wbuf_ref[...].astype(jnp.float32)
        inv_w = lax.rsqrt(
            jnp.maximum(jnp.sum(w * w, axis=-1, keepdims=True), 1e-24))
        wbuf_ref[...] = (w * inv_w).astype(mxu_dtype)

    # Normalize the batch tile in f32, then cast to the MXU operand dtype.
    # F.normalize: x / max(||x||, 1e-12) == x * rsqrt(max(||x||^2, 1e-24)).
    x = x_ref[...].astype(jnp.float32)                          # (tb, D)
    inv_x = lax.rsqrt(
        jnp.maximum(jnp.sum(x * x, axis=-1, keepdims=True), 1e-24))
    xn = (x * inv_x).astype(mxu_dtype)

    # cosine (tb, C): contract the last dims of both operands (the MXU streams
    # the RHS transposed, no physical transpose), f32 accumulation.
    cos = lax.dot_general(xn, wbuf_ref[...],
                          (((1,), (1,)), ((), ())),
                          preferred_element_type=jnp.float32)   # (tb, C)

    lab = labels_ref[...]                                       # (tb, 1) int32
    cls = lax.broadcasted_iota(jnp.int32, cos.shape, 1)         # lane iota
    one_hot = cls == lab                                        # (tb, C) bool
    valid = lab >= 0                                            # pad rows: -1

    # Positive-class cosine per row (at most one positive per row).
    cos_pos = jnp.sum(jnp.where(one_hot, cos, 0.0), axis=1, keepdims=True)

    # tp partial: sum(clamp(cos, min=0) * one_hot * 2).
    tp_part = 2.0 * jnp.sum(jnp.maximum(cos_pos, 0.0))

    # lossp = sum (1 - c) * exp((1 - c) * sp)  ==  e^sp * sum (1 - c) e^{-sp c}
    # (guarded on valid labels; detach() only affects backward).
    lossp_part = exp_sp * jnp.sum(
        jnp.where(valid, (1.0 - cos_pos) * jnp.exp(-sp * cos_pos), 0.0))

    # lossn over entries with cos > tau that are not the positive class:
    # (c - psi) * exp((c - mu) * sn)  ==  e^{-mu sn} * (c - psi) * e^{sn c}
    neg = jnp.logical_and(cos > tau, jnp.logical_not(one_hot))
    lossn_part = exp_msn * jnp.sum(
        jnp.where(neg, (cos - psi) * jnp.exp(sn * cos), 0.0))

    acc_ref[0] += tp_part
    acc_ref[1] += lossp_part
    acc_ref[2] += lossn_part

    @pl.when(i == pl.num_programs(0) - 1)
    def _finalize():
        tp = acc_ref[0] + jnp.float32(b)
        loss = 1.0 - tp / (tp + acc_ref[1] + acc_ref[2])
        out_ref[...] = jnp.full((1, 1), loss, dtype=jnp.float32)


def _choose_tb(B, D, C, w_itemsize):
    """Batch-tile height: VMEM-bounded, MXU-aligned, sublane-aligned."""
    budget = 24 << 20                        # headroom under the 32 MiB scoped VMEM
    fixed = C * D * w_itemsize               # single resident weight copy
    per_row = 2 * D * 4 + 4 * C * 4          # double-buffered x tile + f32 (tb, C) temps
    cap = max(8, (budget - fixed) // per_row)
    cap = min(cap, 1024)                     # >=512-row tiles already amortize step overhead
    if B <= cap:
        return -(-B // 8) * 8                # single (padded) tile
    for align in (256, 128, 8):              # MXU-friendly heights (256 v6e/v7x, 128 v5e)
        t = (cap // align) * align
        if t >= align:
            return t
    return 8


def cpf_loss(batch, weight, labels, *, sp, sn, tau, psi, mu, b,
             tb=None, mxu_dtype=jnp.bfloat16):
    """batch: (B, D) float, weight: (C, D) float, labels: (B,) int -> scalar."""
    B, D = batch.shape
    C, _ = weight.shape

    w_in = weight.astype(mxu_dtype)
    if tb is None:
        tb = _choose_tb(B, D, C, w_in.dtype.itemsize)
    Bp = -(-B // tb) * tb

    labels_col = labels.astype(jnp.int32).reshape(B, 1)
    x = batch.astype(jnp.float32)
    if Bp != B:
        # Pad the tail: padded rows get label -1 and zero features, so they
        # contribute nothing (lossp is masked on label >= 0; cos rows are 0).
        x = jnp.pad(x, ((0, Bp - B), (0, 0)))
        labels_col = jnp.pad(labels_col, ((0, Bp - B), (0, 0)),
                             constant_values=-1)

    kernel = functools.partial(
        _cpf_kernel, sp=float(sp), sn=float(sn), tau=float(tau),
        psi=float(psi), b=float(b),
        exp_sp=math.exp(float(sp)), exp_msn=math.exp(-float(mu) * float(sn)),
        mxu_dtype=mxu_dtype)

    out = pl.pallas_call(
        kernel,
        out_shape=jax.ShapeDtypeStruct((1, 1), jnp.float32),
        grid_spec=pltpu.PrefetchScalarGridSpec(
            num_scalar_prefetch=0,
            grid=(Bp // tb,),
            in_specs=[
                pl.BlockSpec((tb, 1), lambda i: (i, 0)),   # labels column
                pl.BlockSpec((tb, D), lambda i: (i, 0)),   # batch tile
                pl.BlockSpec(memory_space=pl.ANY),         # weight stays in HBM
            ],
            out_specs=pl.BlockSpec((1, 1), lambda i: (0, 0)),
            scratch_shapes=[
                pltpu.VMEM((C, D), mxu_dtype),   # single resident normalized weight
                pltpu.SMEM((3,), jnp.float32),   # tp / lossp / lossn partials
                pltpu.SemaphoreType.DMA,         # weight-copy completion
            ],
        ),
        # Serial batch axis: SMEM accumulators are carried across steps.
        # TODO(synk): on v7x split the batch axis over the 2 TensorCores via
        # per-tile partial outputs + "parallel" semantics, reduced in the wrapper.
        compiler_params=pltpu.CompilerParams(
            dimension_semantics=("arbitrary",),
            vmem_limit_bytes=32 * 1024 * 1024),
    )(labels_col, x, w_in)
    return out[0, 0]


def cpf_loss_ref(batch, weight, labels, *, sp, sn, tau, psi, mu, b):
    """Pure-JAX f32 reference mirroring the PyTorch forward."""
    xn = batch / jnp.maximum(
        jnp.linalg.norm(batch, axis=-1, keepdims=True), 1e-12)
    wn = weight / jnp.maximum(
        jnp.linalg.norm(weight, axis=-1, keepdims=True), 1e-12)
    cosine = xn @ wn.T
    one_hot = jax.nn.one_hot(labels, weight.shape[0], dtype=jnp.float32)
    tp = jnp.sum(jnp.maximum(cosine, 0.0) * one_hot * 2.0) + b
    lossp = jnp.sum((1.0 - cosine) * jnp.exp((1.0 - cosine) * sp) * one_hot)
    mask = (cosine > tau).astype(jnp.float32)
    lossn = jnp.sum(
        mask * (cosine - psi) * jnp.exp((cosine - mu) * sn) * (1.0 - one_hot))
    return 1.0 - tp / (tp + lossp + lossn)


if __name__ == "__main__":
    # Hyperparameters (opt.*): embed_dim=32, n_classes=16; cpf params below.
    B, D, C = 16, 32, 16
    hp = dict(sp=2.0, sn=2.0, tau=0.2, psi=0.8, mu=0.4, b=1.0)

    key = jax.random.PRNGKey(0)
    k_x, k_w, k_l = jax.random.split(key, 3)

    batch = jax.random.normal(k_x, (B, D), dtype=jnp.float32)
    bound = (6.0 / (C + D)) ** 0.5                       # xavier-uniform init
    weight = jax.random.uniform(k_w, (C, D), dtype=jnp.float32,
                                minval=-bound, maxval=bound)
    labels = jax.random.randint(k_l, (B,), 0, C, dtype=jnp.int32)

    loss = cpf_loss(batch, weight, labels, **hp)         # bf16 MXU operands
    loss = jax.block_until_ready(loss)

    loss_ref = cpf_loss_ref(batch, weight, labels, **hp)
    # bf16 MXU operands => relaxed tolerance; mxu_dtype=jnp.float32 matches 1e-5.
    assert jnp.allclose(loss, loss_ref, atol=5e-3, rtol=5e-3), (loss, loss_ref)

    print("KERNEL_OK")
</pallas_src>

<mosaic_0001>
module attributes {stable_mosaic.version = 11 : i64} {
  func.func @_cpf_kernel(%arg0: i32, %arg1: memref<16x1xi32, #tpu.memory_space<vmem>>, %arg2: memref<16x32xf32, #tpu.memory_space<vmem>>, %arg3: memref<16x32xbf16, #tpu.memory_space<any>>, %arg4: memref<1x1xf32, #tpu.memory_space<vmem>>, %arg5: memref<16x32xbf16, #tpu.memory_space<vmem>>, %arg6: memref<3xf32, #tpu.memory_space<smem>>, %arg7: memref<!tpu.dma_semaphore, #tpu.memory_space<semaphore_mem>>) attributes {dimension_semantics = [#tpu.dimension_semantics<arbitrary>], iteration_bounds = array<i64: 1>, scalar_prefetch = 0 : i64, scratch_operands = 3 : i64, tpu.core_type = #tpu.core_type<tc>, window_params = [{transform_indices = @transform_0, window_bounds = array<i64: 16, 1>}, {transform_indices = @transform_1, window_bounds = array<i64: 16, 32>}, {}, {pipeline_mode = #tpu.pipeline_mode<synchronous>, transform_indices = @transform_3, window_bounds = array<i64: 1, 1>}]} {
    %c0_i32 = arith.constant 0 : i32
    %0 = arith.cmpi eq, %arg0, %c0_i32 : i32
    %1 = arith.extui %0 : i1 to i32
    %c0_i32_0 = arith.constant 0 : i32
    %2 = arith.cmpi ne, %1, %c0_i32_0 : i32
    scf.if %2 {
      %cst_32 = arith.constant 0.000000e+00 : f32
      %c0_33 = arith.constant 0 : index
      %74 = memref.load %arg6[%c0_33] : memref<3xf32, #tpu.memory_space<smem>>
      memref.store %cst_32, %arg6[%c0_33] : memref<3xf32, #tpu.memory_space<smem>>
      %cst_34 = arith.constant 0.000000e+00 : f32
      %c1_35 = arith.constant 1 : index
      %75 = memref.load %arg6[%c1_35] : memref<3xf32, #tpu.memory_space<smem>>
      memref.store %cst_34, %arg6[%c1_35] : memref<3xf32, #tpu.memory_space<smem>>
      %cst_36 = arith.constant 0.000000e+00 : f32
      %c2_37 = arith.constant 2 : index
      %76 = memref.load %arg6[%c2_37] : memref<3xf32, #tpu.memory_space<smem>>
      memref.store %cst_36, %arg6[%c2_37] : memref<3xf32, #tpu.memory_space<smem>>
      tpu.enqueue_dma source(%arg3 : memref<16x32xbf16, #tpu.memory_space<any>>) target(%arg5 : memref<16x32xbf16, #tpu.memory_space<vmem>>) target_semaphore(%arg7 : memref<!tpu.dma_semaphore, #tpu.memory_space<semaphore_mem>>)
      tpu.wait_dma2 semaphore(%arg7 : memref<!tpu.dma_semaphore, #tpu.memory_space<semaphore_mem>>) src(%arg3 : memref<16x32xbf16, #tpu.memory_space<any>>) dst(%arg5 : memref<16x32xbf16, #tpu.memory_space<vmem>>)
      %c0_38 = arith.constant 0 : index
      %c0_39 = arith.constant 0 : index
      %77 = vector.load %arg5[%c0_38, %c0_39] : memref<16x32xbf16, #tpu.memory_space<vmem>>, vector<16x32xbf16>
      %78 = arith.extf %77 : vector<16x32xbf16> to vector<16x32xf32>
      %79 = arith.mulf %78, %78 : vector<16x32xf32>
      %cst_40 = arith.constant dense<0.000000e+00> : vector<16xf32>
      %80 = vector.multi_reduction <add>, %79, %cst_40 [1] : vector<16x32xf32> to vector<16xf32>
      %81 = vector.shape_cast %80 : vector<16xf32> to vector<16x1xf32>
      %cst_41 = arith.constant 1.000000e-24 : f32
      %82 = vector.broadcast %cst_41 : f32 to vector<16x1xf32>
      %83 = arith.maximumf %81, %82 : vector<16x1xf32>
      %84 = math.rsqrt %83 : vector<16x1xf32>
      %85 = vector.broadcast %84 : vector<16x1xf32> to vector<16x32xf32>
      %86 = arith.mulf %78, %85 : vector<16x32xf32>
      %87 = arith.truncf %86 : vector<16x32xf32> to vector<16x32xbf16>
      %c0_42 = arith.constant 0 : index
      %c0_43 = arith.constant 0 : index
      %88 = vector.load %arg5[%c0_42, %c0_43] : memref<16x32xbf16, #tpu.memory_space<vmem>>, vector<16x32xbf16>
      tpu.vector_store %arg5[%c0_42, %c0_43], %87 {strides = array<i32>} : memref<16x32xbf16, #tpu.memory_space<vmem>>, vector<16x32xbf16>,
    } else {
    }
    %c0 = arith.constant 0 : index
    %c0_1 = arith.constant 0 : index
    %3 = vector.load %arg2[%c0, %c0_1] : memref<16x32xf32, #tpu.memory_space<vmem>>, vector<16x32xf32>
    %4 = arith.mulf %3, %3 : vector<16x32xf32>
    %cst = arith.constant dense<0.000000e+00> : vector<16xf32>
    %5 = vector.multi_reduction <add>, %4, %cst [1] : vector<16x32xf32> to vector<16xf32>
    %6 = vector.shape_cast %5 : vector<16xf32> to vector<16x1xf32>
    %cst_2 = arith.constant 1.000000e-24 : f32
    %7 = vector.broadcast %cst_2 : f32 to vector<16x1xf32>
    %8 = arith.maximumf %6, %7 : vector<16x1xf32>
    %9 = math.rsqrt %8 : vector<16x1xf32>
    %10 = vector.broadcast %9 : vector<16x1xf32> to vector<16x32xf32>
    %11 = arith.mulf %3, %10 : vector<16x32xf32>
    %12 = arith.truncf %11 : vector<16x32xf32> to vector<16x32xbf16>
    %c0_3 = arith.constant 0 : index
    %c0_4 = arith.constant 0 : index
    %13 = vector.load %arg5[%c0_3, %c0_4] : memref<16x32xbf16, #tpu.memory_space<vmem>>, vector<16x32xbf16>
    %cst_5 = arith.constant dense<0.000000e+00> : vector<16x16xf32>
    %14 = tpu.matmul %12, %13, %cst_5 {dimension_numbers = #tpu.dot_dimension_numbers<[1], [1], [0], [0], [0, 0, 1, 0], [], []>} : vector<16x32xbf16>, vector<16x32xbf16>, vector<16x16xf32> -> vector<16x16xf32>
    %c0_6 = arith.constant 0 : index
    %c0_7 = arith.constant 0 : index
    %15 = vector.load %arg1[%c0_6, %c0_7] : memref<16x1xi32, #tpu.memory_space<vmem>>, vector<16x1xi32>
    %16 = tpu.iota {dimensions = array<i32: 1>} : vector<16x16xi32>
    %17 = vector.broadcast %15 : vector<16x1xi32> to vector<16x16xi32>
    %18 = arith.cmpi eq, %16, %17 : vector<16x16xi32>
    %c0_i32_8 = arith.constant 0 : i32
    %19 = vector.broadcast %c0_i32_8 : i32 to vector<16x1xi32>
    %20 = arith.cmpi sge, %15, %19 : vector<16x1xi32>
    %cst_9 = arith.constant 0.000000e+00 : f32
    %21 = vector.broadcast %cst_9 : f32 to vector<16x16xf32>
    %22 = arith.select %18, %14, %21 : vector<16x16xi1>, vector<16x16xf32>
    %cst_10 = arith.constant dense<0.000000e+00> : vector<16xf32>
    %23 = vector.multi_reduction <add>, %22, %cst_10 [1] : vector<16x16xf32> to vector<16xf32>
    %24 = vector.shape_cast %23 : vector<16xf32> to vector<16x1xf32>
    %cst_11 = arith.constant 0.000000e+00 : f32
    %25 = vector.broadcast %cst_11 : f32 to vector<16x1xf32>
    %26 = arith.maximumf %24, %25 : vector<16x1xf32>
    %27 = vector.shape_cast %26 : vector<16x1xf32> to vector<1x16x1xf32>
    %cst_12 = arith.constant dense<0.000000e+00> : vector<1xf32>
    %28 = vector.multi_reduction <add>, %27, %cst_12 [1, 2] : vector<1x16x1xf32> to vector<1xf32>
    %29 = vector.shape_cast %28 : vector<1xf32> to vector<1x1x1xf32>
    %30 = vector.extract %29[0, 0, 0] : f32 from vector<1x1x1xf32>
    %cst_13 = arith.constant 2.000000e+00 : f32
    %31 = arith.mulf %cst_13, %30 : f32
    %cst_14 = arith.constant 1.000000e+00 : f32
    %32 = vector.broadcast %cst_14 : f32 to vector<16x1xf32>
    %33 = arith.subf %32, %24 : vector<16x1xf32>
    %cst_15 = arith.constant -2.000000e+00 : f32
    %34 = vector.broadcast %cst_15 : f32 to vector<16x1xf32>
    %35 = arith.mulf %34, %24 : vector<16x1xf32>
    %36 = math.exp %35 : vector<16x1xf32>
    %37 = arith.mulf %33, %36 : vector<16x1xf32>
    %cst_16 = arith.constant 0.000000e+00 : f32
    %38 = vector.broadcast %cst_16 : f32 to vector<16x1xf32>
    %39 = arith.select %20, %37, %38 : vector<16x1xi1>, vector<16x1xf32>
    %40 = vector.shape_cast %39 : vector<16x1xf32> to vector<1x16x1xf32>
    %cst_17 = arith.constant dense<0.000000e+00> : vector<1xf32>
    %41 = vector.multi_reduction <add>, %40, %cst_17 [1, 2] : vector<1x16x1xf32> to vector<1xf32>
    %42 = vector.shape_cast %41 : vector<1xf32> to vector<1x1x1xf32>
    %43 = vector.extract %42[0, 0, 0] : f32 from vector<1x1x1xf32>
    %cst_18 = arith.constant 7.3890562 : f32
    %44 = arith.mulf %cst_18, %43 : f32
    %cst_19 = arith.constant 2.000000e-01 : f32
    %45 = vector.broadcast %cst_19 : f32 to vector<16x16xf32>
    %46 = arith.cmpf ogt, %14, %45 : vector<16x16xf32>
    %cst_20 = arith.constant dense<true> : vector<16x16xi1>
    %47 = arith.xori %18, %cst_20 : vector<16x16xi1>
    %48 = arith.andi %46, %47 : vector<16x16xi1>
    %cst_21 = arith.constant 8.000000e-01 : f32
    %49 = vector.broadcast %cst_21 : f32 to vector<16x16xf32>
    %50 = arith.subf %14, %49 : vector<16x16xf32>
    %cst_22 = arith.constant 2.000000e+00 : f32
    %51 = vector.broadcast %cst_22 : f32 to vector<16x16xf32>
    %52 = arith.mulf %51, %14 : vector<16x16xf32>
    %53 = math.exp %52 : vector<16x16xf32>
    %54 = arith.mulf %50, %53 : vector<16x16xf32>
    %cst_23 = arith.constant 0.000000e+00 : f32
    %55 = vector.broadcast %cst_23 : f32 to vector<16x16xf32>
    %56 = arith.select %48, %54, %55 : vector<16x16xi1>, vector<16x16xf32>
    %57 = vector.shape_cast %56 : vector<16x16xf32> to vector<1x16x16xf32>
    %cst_24 = arith.constant dense<0.000000e+00> : vector<1xf32>
    %58 = vector.multi_reduction <add>, %57, %cst_24 [1, 2] : vector<1x16x16xf32> to vector<1xf32>
    %59 = vector.shape_cast %58 : vector<1xf32> to vector<1x1x1xf32>
    %60 = vector.extract %59[0, 0, 0] : f32 from vector<1x1x1xf32>
    %cst_25 = arith.constant 0.449328959 : f32
    %61 = arith.mulf %cst_25, %60 : f32
    %c0_26 = arith.constant 0 : index
    %62 = memref.load %arg6[%c0_26] : memref<3xf32, #tpu.memory_space<smem>>
    %63 = arith.addf %62, %31 : f32
    %c0_27 = arith.constant 0 : index
    %64 = memref.load %arg6[%c0_27] : memref<3xf32, #tpu.memory_space<smem>>
    memref.store %63, %arg6[%c0_27] : memref<3xf32, #tpu.memory_space<smem>>
    %c1 = arith.constant 1 : index
    %65 = memref.load %arg6[%c1] : memref<3xf32, #tpu.memory_space<smem>>
    %66 = arith.addf %65, %44 : f32
    %c1_28 = arith.constant 1 : index
    %67 = memref.load %arg6[%c1_28] : memref<3xf32, #tpu.memory_space<smem>>
    memref.store %66, %arg6[%c1_28] : memref<3xf32, #tpu.memory_space<smem>>
    %c2 = arith.constant 2 : index
    %68 = memref.load %arg6[%c2] : memref<3xf32, #tpu.memory_space<smem>>
    %69 = arith.addf %68, %61 : f32
    %c2_29 = arith.constant 2 : index
    %70 = memref.load %arg6[%c2_29] : memref<3xf32, #tpu.memory_space<smem>>
    memref.store %69, %arg6[%c2_29] : memref<3xf32, #tpu.memory_space<smem>>
    %c0_i32_30 = arith.constant 0 : i32
    %71 = arith.cmpi eq, %arg0, %c0_i32_30 : i32
    %72 = arith.extui %71 : i1 to i32
    %c0_i32_31 = arith.constant 0 : i32
    %73 = arith.cmpi ne, %72, %c0_i32_31 : i32
    scf.if %73 {
      %c0_32 = arith.constant 0 : index
      %74 = memref.load %arg6[%c0_32] : memref<3xf32, #tpu.memory_space<smem>>
      %cst_33 = arith.constant 1.000000e+00 : f32
      %75 = arith.addf %74, %cst_33 : f32
      %c1_34 = arith.constant 1 : index
      %76 = memref.load %arg6[%c1_34] : memref<3xf32, #tpu.memory_space<smem>>
      %77 = arith.addf %75, %76 : f32
      %c2_35 = arith.constant 2 : index
      %78 = memref.load %arg6[%c2_35] : memref<3xf32, #tpu.memory_space<smem>>
      %79 = arith.addf %77, %78 : f32
      %80 = arith.divf %75, %79 : f32
      %cst_36 = arith.constant 1.000000e+00 : f32
      %81 = arith.subf %cst_36, %80 : f32
      %82 = vector.broadcast %81 : f32 to vector<1x1xf32>
      %c0_37 = arith.constant 0 : index
      %c0_38 = arith.constant 0 : index
      %83 = vector.load %arg4[%c0_37, %c0_38] : memref<1x1xf32, #tpu.memory_space<vmem>>, vector<1x1xf32>
      tpu.vector_store %arg4[%c0_37, %c0_38], %82 {strides = array<i32>} : memref<1x1xf32, #tpu.memory_space<vmem>>, vector<1x1xf32>,
    } else {
    }
    return
  }
  func.func @transform_0(%arg0: i32) -> (i32, i32) {
    %c0_i32 = arith.constant 0 : i32
    %c0_i32_0 = arith.constant 0 : i32
    return %arg0, %c0_i32 : i32, i32
  }
  func.func @transform_1(%arg0: i32) -> (i32, i32) {
    %c0_i32 = arith.constant 0 : i32
    %c0_i32_0 = arith.constant 0 : i32
    return %arg0, %c0_i32 : i32, i32
  }
  func.func @transform_3(%arg0: i32) -> (i32, i32) {
    %c0_i32 = arith.constant 0 : i32
    %c0_i32_0 = arith.constant 0 : i32
    %c0_i32_1 = arith.constant 0 : i32
    return %c0_i32, %c0_i32_0 : i32, i32
  }
}

</mosaic_0001>

<llo_original>
// kernel: tpu_custom_call.1
$region0: #{tpu_custom_call.1}
  #allocation0 [shape = 'u32[]', space=smem, size = 0x4, offset = 0x4, fixed_abs, tag = 'smem constant byte address 0x4 - core index']
  #allocation1 [shape = 'u32[144,128]{1,0:T(1,128)}', space=vmem, size = 0x12000, scoped, tag = 'internal scratch']
  #allocation2 [shape = 'bf16[16,32]{1,0:T(8,128)(2,1)}', space=vmem, size = 0x1000, scoped, tag = 'scratch operand']
  #allocation3 [shape = 'f32[3]{0:T(128)}', space=smem, size = 0x200, scoped, tag = 'scratch operand']
  #allocation4 [shape = 's32[1]{0}', space=sflag, size = 0x4, scoped, tag = 'scratch operand']
  #allocation7 [shape = 's32[]', space=sflag, size = 0x4, offset = 0, fixed_abs, tag = 'sflag constant byte address 0x0 - dummy sync flag']
  #allocation8 [shape = 's32[]', space=sflag, size = 0x4, offset = 0, fixed_abs, tag = 'sflag constant byte address 0x0 - dummy sync flag']
  #allocation9 [shape = 'u32[]', space=smem, size = 0x4, offset = 0x44, fixed_abs, tag = 'smem constant byte address 0x44 - assertion arg 0']
  #allocation10 [shape = 'u32[]', space=smem, size = 0x4, offset = 0x48, fixed_abs, tag = 'smem constant byte address 0x48 - assertion arg 1']
  %s0 = inlined_call_operand.vmem [shape: s32[16,1], index: 0, kind: input, shape index: {}]
  %s1 = inlined_call_operand.vmem [shape: f32[16,32], index: 1, kind: input, shape index: {}]
  %s2 = inlined_call_operand.hbm [shape: bf16[16,32], index: 2, kind: input, shape index: {}]
  %s3 = inlined_call_operand.hbm [shape: f32[1,1], index: 3, kind: output, shape index: {}]
  %s4 = sld [smem:[#allocation0]]
  $region30: #{tpu_custom_call.1} parent=0
    _
  %s6 = ssub.s32 1, %s4
  %s7 = scalar_select 0, %s6, %s4
  $region1: #{tpu_custom_call.1} parent=0
    #allocation5 [shape = 'u8[512]{0}', space=vmem, size = 0x400, scoped, tag = 'output window, operand 0, single buffered']
    #allocation6 [shape = 's32[1]{0}', space=sflag, size = 0x4, scoped, tag = 'scoped memory for tpu_custom_call.1']
    %8 = vsyncpa [#allocation6], 0
    // Predicated region
    $region2: #{tpu_custom_call.1} parent=1 // pred_check
      _
    $region3: #{tpu_custom_call.1} parent=1 // pred_check_branch
      %10 = sbr.rel (0) target = $region5
    $region4: #{tpu_custom_call.1} parent=1 // pred_region
      _
    $region5: #{tpu_custom_call.1} parent=1 // pred_fallthru
      _
    // Predicated region
    $region6: #{tpu_custom_call.1} parent=1 // pred_check
      _
    $region7: #{tpu_custom_call.1} parent=1 // pred_check_branch
      %12 = sbr.rel (0) target = $region9
    $region8: #{tpu_custom_call.1} parent=1 // pred_region
      _
    $region9: #{tpu_custom_call.1} parent=1 // pred_fallthru
      _
    %p14 = scmp.eq.s32.totalorder 0, 0
    // Predicated region
    $region10: #{tpu_custom_call.1} parent=1 // pred_check
      %p15 = pneg %p14
    $region11: #{tpu_custom_call.1} parent=1 // pred_check_branch
      %17 = sbr.rel (%p15) target = $region13
    $region12: #{tpu_custom_call.1} parent=1 // pred_region
      %s18 = scalar_lea.smem [#allocation3], 0
      %19 = sst [smem:[%s18]] 0.0
      %s20 = scalar_lea.smem [#allocation3], 1
      %21 = sst [smem:[%s20]] 0.0
      %s22 = scalar_lea.smem [#allocation3], 2
      %23 = sst [smem:[%s22]] 0.0
      // Predicated region
      $region14: #{tpu_custom_call.1} parent=12 // pred_check
        _
      $region15: #{tpu_custom_call.1} parent=12 // pred_check_branch
        %25 = sbr.rel target = $region17
      $region16: #{tpu_custom_call.1} parent=12 // pred_region
        %26 = sst [smem:[#allocation9]] [#allocation8]
        %27 = sst [smem:[#allocation10]] [#allocation7]
      $region17: #{tpu_custom_call.1} parent=12 // pred_fallthru
        _
      %29 = shalt.err (0)
      %s31 = sshll.u32 [#allocation2], 4
      %s32 = int_to_ptr.vmem [resolvable:$true] %s31
      %34 = dma.hbm_to_vmem [thread:$0]  %s2, 128, %s32, [#allocation4]
      %s35 = smul.u32 4, 2
      %s36 = smul.u32 %s35, 1
      %s37 = sshll.u32 %s36, 4
      %38 = dma.done [#allocation4], %s37
      %v39 = vld [vmem:[#allocation2] sm:$0xf]
      %v40 = vld [vmem:[#allocation2 + $0x4] sm:$0xf]
      %v41 = vunpack.c.l.bf16 %v39
      %v42 = vunpack.c.l.bf16 %v40
      %v43 = vmul.f32 %v41, %v41
      %v44 = vmul.f32 %v42, %v42
      %vm45 = vcmask 261120
      %v46 = vsel %vm45, %v43, 0.0
      %47 = vadd.xlane.f32.xlu0 %v46
      %v48 = vpop.xlane.xlu0 %47
      %v49 = vsel %vm45, %v44, 0.0
      %50 = vadd.xlane.f32.xlu0 %v49
      %v51 = vpop.xlane.xlu0 %50
      %v52 = vmax.f32 %v48, 1e-24
      %v53 = vmax.f32 %v51, 1e-24
      %v54 = vrsqrt.pop %v52
      %v55 = vrsqrt.pop %v53
      %v56 = vmul.f32 %v41, %v54
      %v57 = vmul.f32 %v42, %v55
      %v58 = vpack.c.bf16 %v57, %v56
      %v60 = vunpack.c.l.b16 %v58
      %v61 = vunpack.c.h.b16 %v58
      %v62 = vpack.c.b16 %v60, %v60
      %v63 = vpack.c.b16 %v61, %v61
      %vm66 = vcmask 257024
      %67 = vst.msk [vmem:[#allocation2] sm:$0xf] %vm66, %v62
      %68 = vst.msk [vmem:[#allocation2 + $0x4] sm:$0xf] %vm66, %v63
    $region13: #{tpu_custom_call.1} parent=1 // pred_fallthru
      _
    %v69 = vld [vmem:[%s1] sm:$0xff]
    %v70 = vld [vmem:[%s1 + $0x8] sm:$0xff]
    %v71 = vmul.f32 %v69, %v69
    %v72 = vmul.f32 %v70, %v70
    %vm73 = vcmask 261120
    %v74 = vsel %vm73, %v71, 0.0
    %75 = vadd.xlane.f32.xlu0 %v74
    %v76 = vpop.xlane.xlu0 %75
    %v77 = vsel %vm73, %v72, 0.0
    %78 = vadd.xlane.f32.xlu0 %v77
    %v79 = vpop.xlane.xlu0 %78
    %v80 = vmax.f32 %v76, 1e-24
    %v81 = vmax.f32 %v79, 1e-24
    %v82 = vrsqrt.pop %v80
    %v83 = vrsqrt.pop %v81
    %v84 = vmul.f32 %v69, %v82
    %v85 = vmul.f32 %v70, %v83
    %v86 = vpack.c.bf16 %v85, %v84
    %v87 = vld [vmem:[#allocation2] sm:$0xf]
    %v88 = vld [vmem:[#allocation2 + $0x4] sm:$0xf]
    %v91 = vunpack.c.l.b16 %v87
    %v92 = vunpack.c.l.b16 %v88
    %v93 = vpack.c.b16 %v92, %v91
    %v95 = vsel %vm73, %v86, 0
    %v98 = vsel %vm73, %v93, 0
    %100 = vmatprep.subr.bf16.mxu0 0
    %101 = vmatpush1.bf16.xpose.msra.mxu0 0
    %102 = vmatprep.subr.bf16.mxu0 0
    %103 = vmatpush1.bf16.xpose.msra.mxu0 0
    %104 = vmatprep.subr.bf16.mxu0 0
    %105 = vmatpush1.bf16.xpose.msra.mxu0 0
    %106 = vmatprep.subr.bf16.mxu0 0
    %107 = vmatpush1.bf16.xpose.msra.mxu0 0
    %108 = vmatprep.subr.bf16.mxu0 0
    %109 = vmatpush1.bf16.xpose.msra.mxu0 0
    %110 = vmatprep.subr.bf16.mxu0 0
    %111 = vmatpush1.bf16.xpose.msra.mxu0 0
    %112 = vmatprep.subr.bf16.mxu0 0
    %113 = vmatpush1.bf16.xpose.msra.mxu0 0
    %114 = vmatprep.subr.bf16.mxu0 0
    %115 = vmatpush1.bf16.xpose.msra.mxu0 %v98
    %116 = vmatprep.subr.bf16.mxu0 0
    %117 = vmatpush2.bf16.xpose.msra.mxu0 0
    %118 = vmatprep.subr.bf16.mxu0 0
    %119 = vmatpush2.bf16.xpose.msra.mxu0 0
    %120 = vmatprep.subr.bf16.mxu0 0
    %121 = vmatpush2.bf16.xpose.msra.mxu0 0
    %122 = vmatprep.subr.bf16.mxu0 0
    %123 = vmatpush2.bf16.xpose.msra.mxu0 0
    %124 = vmatprep.subr.bf16.mxu0 0
    %125 = vmatpush2.bf16.xpose.msra.mxu0 0
    %126 = vmatprep.subr.bf16.mxu0 0
    %127 = vmatpush2.bf16.xpose.msra.mxu0 0
    %128 = vmatprep.subr.bf16.mxu0 0
    %129 = vmatpush2.bf16.xpose.msra.mxu0 0
    %130 = vmatprep.subr.bf16.mxu0 0
    %131 = vmatpush2.bf16.xpose.msra.mxu0 0
    %132 = vmatprep.mubr.bf16.mxu0 0
    %133 = vmatmul.mubr.bf16.gmra.mxu0 %v95
    %v134 = vpop.f32.mrf.mxu0
    %v135 = vadd.f32 0.0, %v134
    %v136 = vpop.f32.mrf.mxu0
    %v137 = vpop.f32.mrf.mxu0
    %v138 = vadd.f32 0.0, %v137
    %v139 = vpop.f32.mrf.mxu0
    %140 = vdwg.mxu0
    %v141 = vld [vmem:[%s0] sm:$0xff]
    %v142 = vld [vmem:[%s0 + $0x8] sm:$0xff]
    %v143 = vlaneseq
    %v144 = vand.u32 %v143, 127
    %145 = vset.pattern.permute.xlu0 0
    %146 = vperm.xlu0 %145, %v141
    %v147 = vpop.permute.xlu0 %146
    %148 = vset.pattern.permute.xlu0 0
    %149 = vperm.xlu0 %148, %v142
    %v150 = vpop.permute.xlu0 %149
    %vm151 = vcmp.eq.s32.totalorder %v144, %v147
    %vm152 = vcmp.eq.s32.totalorder %v144, %v150
    %vm153 = vcmp.ge.s32.totalorder %v141, 0
    %vm154 = vcmp.ge.s32.totalorder %v142, 0
    %v155 = vsel %vm151, %v135, 0.0
    %v156 = vsel %vm152, %v138, 0.0
    %vm157 = vcmask 130048
    %v158 = vsel %vm157, %v155, 0.0
    %159 = vadd.xlane.f32.xlu0 %v158
    %v160 = vpop.xlane.xlu0 %159
    %v161 = vsel %vm157, %v156, 0.0
    %162 = vadd.xlane.f32.xlu0 %v161
    %v163 = vpop.xlane.xlu0 %162
    %v164 = vmax.f32 %v160, 0.0
    %v165 = vmax.f32 %v163, 0.0
    %vm166 = vcmask 7168
    %v167 = vsel %vm166, %v164, 0.0
    %v168 = vsel %vm166, %v165, 0.0
    %v169 = vadd.f32 %v167, %v168
    %170 = vadd.xlane.f32.xlu0 %v169
    %v171 = vpop.xlane.xlu0 %170
    %v172 = vrot.slane %v171, 4
    %v173 = vadd.f32 %v171, %v172
    %v174 = vrot.slane %v173, 2
    %v175 = vadd.f32 %v173, %v174
    %v176 = vrot.slane %v175, 1
    %v177 = vadd.f32 %v175, %v176
    %s178 = vtos %v177
    %s179 = smul.f32 %s178, 2.0
    %v180 = vsub.f32 1.0, %v160
    %v181 = vsub.f32 1.0, %v163
    %v182 = vmul.f32 %v160, -2.0
    %v183 = vmul.f32 %v163, -2.0
    %v184 = vmul.f32 %v182, 1.442695
    %v185 = vpow.pop %v184
    %v186 = vmul.f32 %v183, 1.442695
    %v187 = vpow.pop %v186
    %v188 = vmul.f32 %v180, %v185
    %v189 = vmul.f32 %v181, %v187
    %v190 = vsel %vm153, %v188, 0.0
    %v191 = vsel %vm154, %v189, 0.0
    %v192 = vsel %vm166, %v190, 0.0
    %v193 = vsel %vm166, %v191, 0.0
    %v194 = vadd.f32 %v192, %v193
    %195 = vadd.xlane.f32.xlu0 %v194
    %v196 = vpop.xlane.xlu0 %195
    %v197 = vrot.slane %v196, 4
    %v198 = vadd.f32 %v196, %v197
    %v199 = vrot.slane %v198, 2
    %v200 = vadd.f32 %v198, %v199
    %v201 = vrot.slane %v200, 1
    %v202 = vadd.f32 %v200, %v201
    %s203 = vtos %v202
    %s204 = smul.f32 %s203, 7.389056
    %vm205 = vcmp.gt.f32.partialorder %v135, 0.2
    %vm206 = vcmp.gt.f32.partialorder %v138, 0.2
    %vm207 = vmxor %vm151, 1
    %vm208 = vmxor %vm152, 1
    %vm209 = vmand %vm205, %vm207
    %vm210 = vmand %vm206, %vm208
    %v211 = vsub.f32 %v135, 0.8
    %v212 = vsub.f32 %v138, 0.8
    %v213 = vmul.f32 %v135, 2.0
    %v214 = vmul.f32 %v138, 2.0
    %v215 = vmul.f32 %v213, 1.442695
    %v216 = vpow.pop %v215
    %v217 = vmul.f32 %v214, 1.442695
    %v218 = vpow.pop %v217
    %v219 = vmul.f32 %v211, %v216
    %v220 = vmul.f32 %v212, %v218
    %v221 = vsel %vm209, %v219, 0.0
    %v222 = vsel %vm210, %v220, 0.0
    %v223 = vsel %vm157, %v221, 0.0
    %v224 = vsel %vm157, %v222, 0.0
    %v225 = vadd.f32 %v223, %v224
    %226 = vadd.xlane.f32.xlu0 %v225
    %v227 = vpop.xlane.xlu0 %226
    %v228 = vrot.slane %v227, 4
    %v229 = vadd.f32 %v227, %v228
    %v230 = vrot.slane %v229, 2
    %v231 = vadd.f32 %v229, %v230
    %v232 = vrot.slane %v231, 1
    %v233 = vadd.f32 %v231, %v232
    %s234 = vtos %v233
    %s235 = smul.f32 %s234, 0.44932896
    %s236 = sld [smem:[#allocation3]]
    %s237 = sadd.f32 %s236, %s179
    %s238 = scalar_lea.smem [#allocation3], 0
    %239 = sst [smem:[%s238]] %s237
    %s240 = sld [smem:[#allocation3 + $0x1]]
    %s241 = sadd.f32 %s240, %s204
    %s242 = scalar_lea.smem [#allocation3], 1
    %243 = sst [smem:[%s242]] %s241
    %s244 = sld [smem:[#allocation3 + $0x2]]
    %s245 = sadd.f32 %s244, %s235
    %s246 = scalar_lea.smem [#allocation3], 2
    %247 = sst [smem:[%s246]] %s245
    // Predicated region
    $region18: #{tpu_custom_call.1} parent=1 // pred_check
      %p248 = pneg %p14
    $region19: #{tpu_custom_call.1} parent=1 // pred_check_branch
      %250 = sbr.rel (%p248) target = $region21
    $region20: #{tpu_custom_call.1} parent=1 // pred_region
      %s251 = sld [smem:[#allocation3]]
      %s252 = sadd.f32 %s251, 1.0
      %s253 = sld [smem:[#allocation3 + $0x1]]
      %s254 = sadd.f32 %s252, %s253
      %s255 = sld [smem:[#allocation3 + $0x2]]
      %s256 = sadd.f32 %s254, %s255
      %v257 = vstv %s256
      %v258 = vrcp.pop %v257
      %s259 = vtos %v258
      %s260 = smul.f32 %s252, %s259
      %s261 = ssub.f32 1.0, %s260
      %v262 = vstv %s261
      %vm263 = vcmask 0
      %264 = vst.msk [vmem:[#allocation5] sm:$0x1] %vm263, %v262
    $region21: #{tpu_custom_call.1} parent=1 // pred_fallthru
      _
    // Predicated region
    $region22: #{tpu_custom_call.1} parent=1 // pred_check
      _
    $region23: #{tpu_custom_call.1} parent=1 // pred_check_branch
      %266 = sbr.rel (0) target = $region25
    $region24: #{tpu_custom_call.1} parent=1 // pred_region
      %s268 = ssub.s32 16, 16
      %269 = vsyncadd [#allocation6], %s268
      %s271 = sshll.u32 [#allocation5], 4
      %s272 = int_to_ptr.vmem [resolvable:$true] %s271
      %274 = dma.vmem_to_hbm [thread:$0]  %s272, 16, %s3, [#allocation6]
    $region25: #{tpu_custom_call.1} parent=1 // pred_fallthru
      _
    // Predicated region
    $region26: #{tpu_custom_call.1} parent=1 // pred_check
      _
    $region27: #{tpu_custom_call.1} parent=1 // pred_check_branch
      %276 = sbr.rel (0) target = $region29
    $region28: #{tpu_custom_call.1} parent=1 // pred_region
      %277 = dma.done [#allocation6], 16
    $region29: #{tpu_custom_call.1} parent=1 // pred_fallthru
      _
    %278 = vsyncpa [#allocation6], 1
  %279 = vsyncmov [#allocation4]
  %s280 = vpop.sfrf %279
  %p281 = scmp.eq.s32.totalorder %s280, 0
  %p282 = pneg %p281
  %284 = shalt.err (%p282)

</llo_original>
